<compile_context>
chip_gen: v7x
topology: tpu7x:2x2x1
jax: 0.10.0
libtpu: 0.0.40
codegen_flags: <defaults>
</compile_context>

<pallas_src>
import functools

import jax
import jax.numpy as jnp
from jax.experimental import pallas as pl
from jax.experimental.pallas import tpu as pltpu


def _critic_kernel(x_ref, u_ref,
                   wx_ref, wu_ref, b1_ref,
                   w2_ref, b2_ref,
                   w3_ref, b3_ref,
                   q_ref):
    # Fused layer 1: [h1 | h2] = relu(x @ [W1x|W4x] + u @ [W1u|W4u] + [b1|b4])
    h = jnp.dot(x_ref[...], wx_ref[...], preferred_element_type=jnp.float32)
    h = h + jnp.dot(u_ref[...], wu_ref[...], preferred_element_type=jnp.float32)
    h = jnp.maximum(h + b1_ref[...], 0.0)

    # Fused layer 2: block-diag(W2, W5) keeps the two heads independent.
    h = jnp.dot(h, w2_ref[...], preferred_element_type=jnp.float32) + b2_ref[...]
    h = jnp.maximum(h, 0.0)

    # Fused layer 3: block-diag(W3, W6) -> lane-packed (tile, 2) output
    # (q1 in lane 0, q2 in lane 1).
    q = jnp.dot(h, w3_ref[...], preferred_element_type=jnp.float32) + b3_ref[...]
    q_ref[...] = q.astype(q_ref.dtype)


def _round_up(n, m):
    return ((n + m - 1) // m) * m


def pack_critic_params(params, state_in_dim):
    """Pack the six per-layer (W, b) pairs into the fused kernel operands."""
    w1, w4 = params["w1"], params["w4"]
    h = w1.shape[1]
    zero_hh = jnp.zeros((h, h), jnp.float32)
    zero_h1 = jnp.zeros((h, 1), jnp.float32)
    packed = dict(
        wx=jnp.concatenate([w1[:state_in_dim], w4[:state_in_dim]], axis=1),  # (s_in, 2h)
        wu=jnp.concatenate([w1[state_in_dim:], w4[state_in_dim:]], axis=1),  # (a_in, 2h)
        b1=jnp.concatenate([params["b1"], params["b4"]], axis=1),            # (1, 2h)
        w2=jnp.block([[params["w2"], zero_hh], [zero_hh, params["w5"]]]),    # (2h, 2h)
        b2=jnp.concatenate([params["b2"], params["b5"]], axis=1),            # (1, 2h)
        w3=jnp.block([[params["w3"], zero_h1], [zero_h1, params["w6"]]]),    # (2h, 2)
        b3=jnp.concatenate([params["b3"], params["b6"]], axis=1),            # (1, 2)
    )
    return packed


@functools.partial(jax.jit, static_argnames=("batch_tile",))
def critic_forward(x, u, packed, *, batch_tile=512):
    """Pallas equivalent of Critic.forward(x, u) -> (q1, q2)."""
    B, s_in = x.shape
    a_in = u.shape[1]

    # Batch tile: multiple of 8 sublanes, no larger than needed.
    tile = min(batch_tile, _round_up(B, 8))
    b_pad = _round_up(B, tile)
    if b_pad != B:
        x = jnp.pad(x, ((0, b_pad - B), (0, 0)))
        u = jnp.pad(u, ((0, b_pad - B), (0, 0)))
    grid = (b_pad // tile,)

    def full(shape):
        # Weights/biases: constant block index -> stays resident in VMEM
        # across the whole batch grid (DMA'd once).
        return pl.BlockSpec(shape, lambda i: (0, 0))

    q = pl.pallas_call(
        _critic_kernel,
        out_shape=jax.ShapeDtypeStruct((b_pad, 2), jnp.float32),
        grid=grid,
        in_specs=[
            pl.BlockSpec((tile, s_in), lambda i: (i, 0)),   # x
            pl.BlockSpec((tile, a_in), lambda i: (i, 0)),   # u
            full(packed["wx"].shape),
            full(packed["wu"].shape),
            full(packed["b1"].shape),
            full(packed["w2"].shape),
            full(packed["b2"].shape),
            full(packed["w3"].shape),
            full(packed["b3"].shape),
        ],
        out_specs=pl.BlockSpec((tile, 2), lambda i: (i, 0)),
        compiler_params=pltpu.CompilerParams(
            dimension_semantics=("parallel",)),
    )(x, u, packed["wx"], packed["wu"], packed["b1"],
      packed["w2"], packed["b2"], packed["w3"], packed["b3"])

    q = q[:B]
    return q[:, 0:1], q[:, 1:2]


def init_critic_params(key, state_dim, action_dim, h_size, window_in=1):
    """Deterministic parameter init mirroring nn.Linear shapes.

    Weights stored as (in_features, out_features) = PyTorch weight transposed.
    """
    in_dim = state_dim * window_in + action_dim

    def linear(k, fan_in, fan_out):
        kw, kb = jax.random.split(k)
        bound = 1.0 / jnp.sqrt(fan_in)  # PyTorch default uniform(-1/sqrt(fan_in), ...)
        w = jax.random.uniform(kw, (fan_in, fan_out), jnp.float32, -bound, bound)
        b = jax.random.uniform(kb, (1, fan_out), jnp.float32, -bound, bound)
        return w, b

    keys = jax.random.split(key, 6)
    w1, b1 = linear(keys[0], in_dim, h_size)
    w2, b2 = linear(keys[1], h_size, h_size)
    w3, b3 = linear(keys[2], h_size, 1)
    w4, b4 = linear(keys[3], in_dim, h_size)
    w5, b5 = linear(keys[4], h_size, h_size)
    w6, b6 = linear(keys[5], h_size, 1)
    return dict(w1=w1, b1=b1, w2=w2, b2=b2, w3=w3, b3=b3,
                w4=w4, b4=b4, w5=w5, b5=b5, w6=w6, b6=b6)


def critic_forward_ref(x, u, p):
    """Pure-JAX reference (unfused, matches the PyTorch module exactly)."""
    xu = jnp.concatenate([x, u], axis=1)
    h1 = jax.nn.relu(xu @ p["w1"] + p["b1"])
    h1 = jax.nn.relu(h1 @ p["w2"] + p["b2"])
    q1 = h1 @ p["w3"] + p["b3"]
    h2 = jax.nn.relu(xu @ p["w4"] + p["b4"])
    h2 = jax.nn.relu(h2 @ p["w5"] + p["b5"])
    q2 = h2 @ p["w6"] + p["b6"]
    return q1, q2


if __name__ == "__main__":
    # Small, module-consistent shapes.
    batch = 2
    state_dim = 8
    action_dim = 2
    h_size = 32
    window_in = 1

    key = jax.random.PRNGKey(0)
    k_params, k_x, k_u = jax.random.split(key, 3)

    params = init_critic_params(k_params, state_dim, action_dim, h_size, window_in)
    packed = pack_critic_params(params, state_dim * window_in)

    x = jax.random.normal(k_x, (batch, state_dim * window_in), jnp.float32)
    u = jax.random.normal(k_u, (batch, action_dim), jnp.float32)

    q1, q2 = critic_forward(x, u, packed)
    q1 = jax.block_until_ready(q1)
    q2 = jax.block_until_ready(q2)

    # Cross-check against the pure-JAX (unfused) reference.
    q1_ref, q2_ref = critic_forward_ref(x, u, params)
    assert q1.shape == (batch, 1) and q2.shape == (batch, 1)
    assert jnp.allclose(q1, q1_ref, atol=1e-4, rtol=1e-4), "Q1 mismatch"
    assert jnp.allclose(q2, q2_ref, atol=1e-4, rtol=1e-4), "Q2 mismatch"

    print("KERNEL_OK")
</pallas_src>

<mosaic_0001>
module attributes {stable_mosaic.version = 11 : i64} {
  func.func @_critic_kernel(%arg0: i32, %arg1: memref<8x8xf32, #tpu.memory_space<vmem>>, %arg2: memref<8x2xf32, #tpu.memory_space<vmem>>, %arg3: memref<8x64xf32, #tpu.memory_space<vmem>>, %arg4: memref<2x64xf32, #tpu.memory_space<vmem>>, %arg5: memref<1x64xf32, #tpu.memory_space<vmem>>, %arg6: memref<64x64xf32, #tpu.memory_space<vmem>>, %arg7: memref<1x64xf32, #tpu.memory_space<vmem>>, %arg8: memref<64x2xf32, #tpu.memory_space<vmem>>, %arg9: memref<1x2xf32, #tpu.memory_space<vmem>>, %arg10: memref<8x2xf32, #tpu.memory_space<vmem>>) attributes {dimension_semantics = [#tpu.dimension_semantics<parallel>], iteration_bounds = array<i64: 1>, scalar_prefetch = 0 : i64, scratch_operands = 0 : i64, tpu.core_type = #tpu.core_type<tc>, window_params = [{transform_indices = @transform_0, window_bounds = array<i64: 8, 8>}, {transform_indices = @transform_1, window_bounds = array<i64: 8, 2>}, {pipeline_mode = #tpu.pipeline_mode<synchronous>, transform_indices = @transform_2, window_bounds = array<i64: 8, 64>}, {pipeline_mode = #tpu.pipeline_mode<synchronous>, transform_indices = @transform_3, window_bounds = array<i64: 2, 64>}, {pipeline_mode = #tpu.pipeline_mode<synchronous>, transform_indices = @transform_4, window_bounds = array<i64: 1, 64>}, {pipeline_mode = #tpu.pipeline_mode<synchronous>, transform_indices = @transform_5, window_bounds = array<i64: 64, 64>}, {pipeline_mode = #tpu.pipeline_mode<synchronous>, transform_indices = @transform_6, window_bounds = array<i64: 1, 64>}, {pipeline_mode = #tpu.pipeline_mode<synchronous>, transform_indices = @transform_7, window_bounds = array<i64: 64, 2>}, {pipeline_mode = #tpu.pipeline_mode<synchronous>, transform_indices = @transform_8, window_bounds = array<i64: 1, 2>}, {transform_indices = @transform_9, window_bounds = array<i64: 8, 2>}]} {
    %c0 = arith.constant 0 : index
    %c0_0 = arith.constant 0 : index
    %0 = vector.load %arg1[%c0, %c0_0] : memref<8x8xf32, #tpu.memory_space<vmem>>, vector<8x8xf32>
    %c0_1 = arith.constant 0 : index
    %c0_2 = arith.constant 0 : index
    %1 = vector.load %arg3[%c0_1, %c0_2] : memref<8x64xf32, #tpu.memory_space<vmem>>, vector<8x64xf32>
    %cst = arith.constant dense<0.000000e+00> : vector<8x64xf32>
    %2 = tpu.matmul %0, %1, %cst {dimension_numbers = #tpu.dot_dimension_numbers<[1], [0], [0], [1], [0, 0, 1, 1], [], []>} : vector<8x8xf32>, vector<8x64xf32>, vector<8x64xf32> -> vector<8x64xf32>
    %c0_3 = arith.constant 0 : index
    %c0_4 = arith.constant 0 : index
    %3 = vector.load %arg2[%c0_3, %c0_4] : memref<8x2xf32, #tpu.memory_space<vmem>>, vector<8x2xf32>
    %c0_5 = arith.constant 0 : index
    %c0_6 = arith.constant 0 : index
    %4 = vector.load %arg4[%c0_5, %c0_6] : memref<2x64xf32, #tpu.memory_space<vmem>>, vector<2x64xf32>
    %cst_7 = arith.constant dense<0.000000e+00> : vector<8x64xf32>
    %5 = tpu.matmul %3, %4, %cst_7 {dimension_numbers = #tpu.dot_dimension_numbers<[1], [0], [0], [1], [0, 0, 1, 1], [], []>} : vector<8x2xf32>, vector<2x64xf32>, vector<8x64xf32> -> vector<8x64xf32>
    %6 = arith.addf %2, %5 : vector<8x64xf32>
    %c0_8 = arith.constant 0 : index
    %c0_9 = arith.constant 0 : index
    %7 = vector.load %arg5[%c0_8, %c0_9] : memref<1x64xf32, #tpu.memory_space<vmem>>, vector<1x64xf32>
    %8 = vector.broadcast %7 : vector<1x64xf32> to vector<8x64xf32>
    %9 = arith.addf %6, %8 : vector<8x64xf32>
    %cst_10 = arith.constant 0.000000e+00 : f32
    %10 = vector.broadcast %cst_10 : f32 to vector<8x64xf32>
    %11 = arith.maximumf %9, %10 : vector<8x64xf32>
    %c0_11 = arith.constant 0 : index
    %c0_12 = arith.constant 0 : index
    %12 = vector.load %arg6[%c0_11, %c0_12] : memref<64x64xf32, #tpu.memory_space<vmem>>, vector<64x64xf32>
    %cst_13 = arith.constant dense<0.000000e+00> : vector<8x64xf32>
    %13 = tpu.matmul %11, %12, %cst_13 {dimension_numbers = #tpu.dot_dimension_numbers<[1], [0], [0], [1], [0, 0, 1, 1], [], []>} : vector<8x64xf32>, vector<64x64xf32>, vector<8x64xf32> -> vector<8x64xf32>
    %c0_14 = arith.constant 0 : index
    %c0_15 = arith.constant 0 : index
    %14 = vector.load %arg7[%c0_14, %c0_15] : memref<1x64xf32, #tpu.memory_space<vmem>>, vector<1x64xf32>
    %15 = vector.broadcast %14 : vector<1x64xf32> to vector<8x64xf32>
    %16 = arith.addf %13, %15 : vector<8x64xf32>
    %cst_16 = arith.constant 0.000000e+00 : f32
    %17 = vector.broadcast %cst_16 : f32 to vector<8x64xf32>
    %18 = arith.maximumf %16, %17 : vector<8x64xf32>
    %c0_17 = arith.constant 0 : index
    %c0_18 = arith.constant 0 : index
    %19 = vector.load %arg8[%c0_17, %c0_18] : memref<64x2xf32, #tpu.memory_space<vmem>>, vector<64x2xf32>
    %cst_19 = arith.constant dense<0.000000e+00> : vector<8x2xf32>
    %20 = tpu.matmul %18, %19, %cst_19 {dimension_numbers = #tpu.dot_dimension_numbers<[1], [0], [0], [1], [0, 0, 1, 1], [], []>} : vector<8x64xf32>, vector<64x2xf32>, vector<8x2xf32> -> vector<8x2xf32>
    %c0_20 = arith.constant 0 : index
    %c0_21 = arith.constant 0 : index
    %21 = vector.load %arg9[%c0_20, %c0_21] : memref<1x2xf32, #tpu.memory_space<vmem>>, vector<1x2xf32>
    %22 = vector.broadcast %21 : vector<1x2xf32> to vector<8x2xf32>
    %23 = arith.addf %20, %22 : vector<8x2xf32>
    %c0_22 = arith.constant 0 : index
    %c0_23 = arith.constant 0 : index
    %24 = vector.load %arg10[%c0_22, %c0_23] : memref<8x2xf32, #tpu.memory_space<vmem>>, vector<8x2xf32>
    tpu.vector_store %arg10[%c0_22, %c0_23], %23 {strides = array<i32>} : memref<8x2xf32, #tpu.memory_space<vmem>>, vector<8x2xf32>,
    return
  }
  func.func @transform_0(%arg0: i32) -> (i32, i32) {
    %c0_i32 = arith.constant 0 : i32
    %c0_i32_0 = arith.constant 0 : i32
    return %arg0, %c0_i32 : i32, i32
  }
  func.func @transform_1(%arg0: i32) -> (i32, i32) {
    %c0_i32 = arith.constant 0 : i32
    %c0_i32_0 = arith.constant 0 : i32
    return %arg0, %c0_i32 : i32, i32
  }
  func.func @transform_2(%arg0: i32) -> (i32, i32) {
    %c0_i32 = arith.constant 0 : i32
    %c0_i32_0 = arith.constant 0 : i32
    %c0_i32_1 = arith.constant 0 : i32
    return %c0_i32, %c0_i32_0 : i32, i32
  }
  func.func @transform_3(%arg0: i32) -> (i32, i32) {
    %c0_i32 = arith.constant 0 : i32
    %c0_i32_0 = arith.constant 0 : i32
    %c0_i32_1 = arith.constant 0 : i32
    return %c0_i32, %c0_i32_0 : i32, i32
  }
  func.func @transform_4(%arg0: i32) -> (i32, i32) {
    %c0_i32 = arith.constant 0 : i32
    %c0_i32_0 = arith.constant 0 : i32
    %c0_i32_1 = arith.constant 0 : i32
    return %c0_i32, %c0_i32_0 : i32, i32
  }
  func.func @transform_5(%arg0: i32) -> (i32, i32) {
    %c0_i32 = arith.constant 0 : i32
    %c0_i32_0 = arith.constant 0 : i32
    %c0_i32_1 = arith.constant 0 : i32
    return %c0_i32, %c0_i32_0 : i32, i32
  }
  func.func @transform_6(%arg0: i32) -> (i32, i32) {
    %c0_i32 = arith.constant 0 : i32
    %c0_i32_0 = arith.constant 0 : i32
    %c0_i32_1 = arith.constant 0 : i32
    return %c0_i32, %c0_i32_0 : i32, i32
  }
  func.func @transform_7(%arg0: i32) -> (i32, i32) {
    %c0_i32 = arith.constant 0 : i32
    %c0_i32_0 = arith.constant 0 : i32
    %c0_i32_1 = arith.constant 0 : i32
    return %c0_i32, %c0_i32_0 : i32, i32
  }
  func.func @transform_8(%arg0: i32) -> (i32, i32) {
    %c0_i32 = arith.constant 0 : i32
    %c0_i32_0 = arith.constant 0 : i32
    %c0_i32_1 = arith.constant 0 : i32
    return %c0_i32, %c0_i32_0 : i32, i32
  }
  func.func @transform_9(%arg0: i32) -> (i32, i32) {
    %c0_i32 = arith.constant 0 : i32
    %c0_i32_0 = arith.constant 0 : i32
    return %arg0, %c0_i32 : i32, i32
  }
}

</mosaic_0001>

<llo_original>
// kernel: critic_forward.1
$region0: #{critic_forward.1}
  #allocation0 [shape = 'u32[]', space=smem, size = 0x4, offset = 0x4, fixed_abs, tag = 'smem constant byte address 0x4 - core index']
  #allocation1 [shape = 'u32[144,128]{1,0:T(1,128)}', space=vmem, size = 0x12000, scoped, tag = 'internal scratch']
  %s0 = inlined_call_operand.vmem [shape: f32[8,8], index: 0, kind: input, shape index: {}]
  %s1 = inlined_call_operand.vmem [shape: f32[8,2], index: 1, kind: input, shape index: {}]
  %s2 = inlined_call_operand.vmem [shape: f32[8,64], index: 2, kind: input, shape index: {}]
  %s3 = inlined_call_operand.vmem [shape: f32[2,64], index: 3, kind: input, shape index: {}]
  %s4 = inlined_call_operand.vmem [shape: f32[1,64], index: 4, kind: input, shape index: {}]
  %s5 = inlined_call_operand.vmem [shape: f32[64,64], index: 5, kind: input, shape index: {}]
  %s6 = inlined_call_operand.vmem [shape: f32[1,64], index: 6, kind: input, shape index: {}]
  %s7 = inlined_call_operand.vmem [shape: f32[64,2], index: 7, kind: input, shape index: {}]
  %s8 = inlined_call_operand.vmem [shape: f32[1,2], index: 8, kind: input, shape index: {}]
  %s9 = inlined_call_operand.vmem [shape: f32[8,2], index: 9, kind: output, shape index: {}]
  %s10 = sld [smem:[#allocation0]]
  $region46: #{critic_forward.1} parent=0
    _
  %s12 = ssub.s32 1, %s10
  %s13 = scalar_select 0, %s12, %s10
  // Predicated region
  $region2: #{critic_forward.1} parent=0 // pred_check
    _
  $region3: #{critic_forward.1} parent=0 // pred_check_branch
    %15 = sbr.rel (0) target = $region5
  $region4: #{critic_forward.1} parent=0 // pred_region
    _
  $region5: #{critic_forward.1} parent=0 // pred_fallthru
    _
  // Predicated region
  $region6: #{critic_forward.1} parent=0 // pred_check
    _
  $region7: #{critic_forward.1} parent=0 // pred_check_branch
    %17 = sbr.rel (0) target = $region9
  $region8: #{critic_forward.1} parent=0 // pred_region
    _
  $region9: #{critic_forward.1} parent=0 // pred_fallthru
    _
  // Predicated region
  $region10: #{critic_forward.1} parent=0 // pred_check
    _
  $region11: #{critic_forward.1} parent=0 // pred_check_branch
    %19 = sbr.rel (0) target = $region13
  $region12: #{critic_forward.1} parent=0 // pred_region
    _
  $region13: #{critic_forward.1} parent=0 // pred_fallthru
    _
  // Predicated region
  $region14: #{critic_forward.1} parent=0 // pred_check
    _
  $region15: #{critic_forward.1} parent=0 // pred_check_branch
    %21 = sbr.rel (0) target = $region17
  $region16: #{critic_forward.1} parent=0 // pred_region
    _
  $region17: #{critic_forward.1} parent=0 // pred_fallthru
    _
  // Predicated region
  $region18: #{critic_forward.1} parent=0 // pred_check
    _
  $region19: #{critic_forward.1} parent=0 // pred_check_branch
    %23 = sbr.rel (0) target = $region21
  $region20: #{critic_forward.1} parent=0 // pred_region
    _
  $region21: #{critic_forward.1} parent=0 // pred_fallthru
    _
  // Predicated region
  $region22: #{critic_forward.1} parent=0 // pred_check
    _
  $region23: #{critic_forward.1} parent=0 // pred_check_branch
    %25 = sbr.rel (0) target = $region25
  $region24: #{critic_forward.1} parent=0 // pred_region
    _
  $region25: #{critic_forward.1} parent=0 // pred_fallthru
    _
  // Predicated region
  $region26: #{critic_forward.1} parent=0 // pred_check
    _
  $region27: #{critic_forward.1} parent=0 // pred_check_branch
    %27 = sbr.rel (0) target = $region29
  $region28: #{critic_forward.1} parent=0 // pred_region
    _
  $region29: #{critic_forward.1} parent=0 // pred_fallthru
    _
  // Predicated region
  $region30: #{critic_forward.1} parent=0 // pred_check
    _
  $region31: #{critic_forward.1} parent=0 // pred_check_branch
    %29 = sbr.rel (0) target = $region33
  $region32: #{critic_forward.1} parent=0 // pred_region
    _
  $region33: #{critic_forward.1} parent=0 // pred_fallthru
    _
  // Predicated region
  $region34: #{critic_forward.1} parent=0 // pred_check
    _
  $region35: #{critic_forward.1} parent=0 // pred_check_branch
    %31 = sbr.rel (0) target = $region37
  $region36: #{critic_forward.1} parent=0 // pred_region
    _
  $region37: #{critic_forward.1} parent=0 // pred_fallthru
    _
  %v32 = vld [vmem:[%s0] sm:$0xff]
  %v33 = vld [vmem:[%s2] sm:$0xff]
  %v34 = vld [vmem:[%s1] sm:$0xff]
  %v35 = vld [vmem:[%s3] sm:$0x3]
  %vm36 = vcmask 15360
  %v38 = vsel %vm36, %v34, 0
  %vm40 = vcmask 1041408
  %v42 = vsel %vm40, %v35, 0
  %44 = vmatprep.subr.mxu0 0.0
  %45 = vmatpush1.msra.mxu0 %v42
  %46 = vmatprep.subr.mxu0 0.0
  %47 = vmatpush1.msra.mxu0 0.0
  %48 = vmatprep.subr.mxu0 0.0
  %49 = vmatpush1.msra.mxu0 0.0
  %50 = vmatprep.subr.mxu0 0.0
  %51 = vmatpush1.msra.mxu0 0.0
  %52 = vmatprep.subr.mxu0 0.0
  %53 = vmatpush1.msra.mxu0 0.0
  %54 = vmatprep.subr.mxu0 0.0
  %55 = vmatpush1.msra.mxu0 0.0
  %56 = vmatprep.subr.mxu0 0.0
  %57 = vmatpush1.msra.mxu0 0.0
  %58 = vmatprep.subr.mxu0 0.0
  %59 = vmatpush1.msra.mxu0 0.0
  %60 = vmatprep.subr.mxu0 0.0
  %61 = vmatpush1.msra.mxu0 0.0
  %62 = vmatprep.subr.mxu0 0.0
  %63 = vmatpush1.msra.mxu0 0.0
  %64 = vmatprep.subr.mxu0 0.0
  %65 = vmatpush1.msra.mxu0 0.0
  %66 = vmatprep.subr.mxu0 0.0
  %67 = vmatpush1.msra.mxu0 0.0
  %68 = vmatprep.subr.mxu0 0.0
  %69 = vmatpush1.msra.mxu0 0.0
  %70 = vmatprep.subr.mxu0 0.0
  %71 = vmatpush1.msra.mxu0 0.0
  %72 = vmatprep.subr.mxu0 0.0
  %73 = vmatpush1.msra.mxu0 0.0
  %74 = vmatprep.subr.mxu0 0.0
  %75 = vmatpush1.msra.mxu0 0.0
  %76 = vmatprep.subr.mxu0 0.0
  %77 = vmatpush1.msra.mxu0 0.0
  %78 = vmatprep.subr.mxu0 0.0
  %79 = vmatpush1.msra.mxu0 0.0
  %80 = vmatprep.subr.mxu0 0.0
  %81 = vmatpush1.msra.mxu0 0.0
  %82 = vmatprep.subr.mxu0 0.0
  %83 = vmatpush1.msra.mxu0 0.0
  %84 = vmatprep.subr.mxu0 0.0
  %85 = vmatpush1.msra.mxu0 0.0
  %86 = vmatprep.subr.mxu0 0.0
  %87 = vmatpush1.msra.mxu0 0.0
  %88 = vmatprep.subr.mxu0 0.0
  %89 = vmatpush1.msra.mxu0 0.0
  %90 = vmatprep.subr.mxu0 0.0
  %91 = vmatpush1.msra.mxu0 0.0
  %92 = vmatprep.subr.mxu0 0.0
  %93 = vmatpush1.msra.mxu0 0.0
  %94 = vmatprep.subr.mxu0 0.0
  %95 = vmatpush1.msra.mxu0 0.0
  %96 = vmatprep.subr.mxu0 0.0
  %97 = vmatpush1.msra.mxu0 0.0
  %98 = vmatprep.subr.mxu0 0.0
  %99 = vmatpush1.msra.mxu0 0.0
  %100 = vmatprep.subr.mxu0 0.0
  %101 = vmatpush1.msra.mxu0 0.0
  %102 = vmatprep.subr.mxu0 0.0
  %103 = vmatpush1.msra.mxu0 0.0
  %104 = vmatprep.subr.mxu0 0.0
  %105 = vmatpush1.msra.mxu0 0.0
  %106 = vmatprep.subr.mxu0 0.0
  %107 = vmatpush1.msra.mxu0 0.0
  %108 = vmatprep.mubr.f32.mxu0 0.0
  %109 = vmatmul.mubr.f32.gmra.mrb[0].mxu0 %v38
  %v110 = vpop.f32.mrb[0].mxu0
  %v111 = vadd.f32 0.0, %v110
  %v112 = vpop.f32.mrb[0].mxu0
  %113 = vdwg.mxu0
  %vm114 = vcmask 64512
  %v116 = vsel %vm114, %v32, 0
  %118 = vmatprep.subr.mxu0 0.0
  %119 = vmatpush1.msra.mxu0 %v33
  %120 = vmatprep.subr.mxu0 0.0
  %121 = vmatpush1.msra.mxu0 0.0
  %122 = vmatprep.subr.mxu0 0.0
  %123 = vmatpush1.msra.mxu0 0.0
  %124 = vmatprep.subr.mxu0 0.0
  %125 = vmatpush1.msra.mxu0 0.0
  %126 = vmatprep.subr.mxu0 0.0
  %127 = vmatpush1.msra.mxu0 0.0
  %128 = vmatprep.subr.mxu0 0.0
  %129 = vmatpush1.msra.mxu0 0.0
  %130 = vmatprep.subr.mxu0 0.0
  %131 = vmatpush1.msra.mxu0 0.0
  %132 = vmatprep.subr.mxu0 0.0
  %133 = vmatpush1.msra.mxu0 0.0
  %134 = vmatprep.subr.mxu0 0.0
  %135 = vmatpush1.msra.mxu0 0.0
  %136 = vmatprep.subr.mxu0 0.0
  %137 = vmatpush1.msra.mxu0 0.0
  %138 = vmatprep.subr.mxu0 0.0
  %139 = vmatpush1.msra.mxu0 0.0
  %140 = vmatprep.subr.mxu0 0.0
  %141 = vmatpush1.msra.mxu0 0.0
  %142 = vmatprep.subr.mxu0 0.0
  %143 = vmatpush1.msra.mxu0 0.0
  %144 = vmatprep.subr.mxu0 0.0
  %145 = vmatpush1.msra.mxu0 0.0
  %146 = vmatprep.subr.mxu0 0.0
  %147 = vmatpush1.msra.mxu0 0.0
  %148 = vmatprep.subr.mxu0 0.0
  %149 = vmatpush1.msra.mxu0 0.0
  %150 = vmatprep.subr.mxu0 0.0
  %151 = vmatpush1.msra.mxu0 0.0
  %152 = vmatprep.subr.mxu0 0.0
  %153 = vmatpush1.msra.mxu0 0.0
  %154 = vmatprep.subr.mxu0 0.0
  %155 = vmatpush1.msra.mxu0 0.0
  %156 = vmatprep.subr.mxu0 0.0
  %157 = vmatpush1.msra.mxu0 0.0
  %158 = vmatprep.subr.mxu0 0.0
  %159 = vmatpush1.msra.mxu0 0.0
  %160 = vmatprep.subr.mxu0 0.0
  %161 = vmatpush1.msra.mxu0 0.0
  %162 = vmatprep.subr.mxu0 0.0
  %163 = vmatpush1.msra.mxu0 0.0
  %164 = vmatprep.subr.mxu0 0.0
  %165 = vmatpush1.msra.mxu0 0.0
  %166 = vmatprep.subr.mxu0 0.0
  %167 = vmatpush1.msra.mxu0 0.0
  %168 = vmatprep.subr.mxu0 0.0
  %169 = vmatpush1.msra.mxu0 0.0
  %170 = vmatprep.subr.mxu0 0.0
  %171 = vmatpush1.msra.mxu0 0.0
  %172 = vmatprep.subr.mxu0 0.0
  %173 = vmatpush1.msra.mxu0 0.0
  %174 = vmatprep.subr.mxu0 0.0
  %175 = vmatpush1.msra.mxu0 0.0
  %176 = vmatprep.subr.mxu0 0.0
  %177 = vmatpush1.msra.mxu0 0.0
  %178 = vmatprep.subr.mxu0 0.0
  %179 = vmatpush1.msra.mxu0 0.0
  %180 = vmatprep.subr.mxu0 0.0
  %181 = vmatpush1.msra.mxu0 0.0
  %182 = vmatprep.mubr.f32.mxu0 0.0
  %183 = vmatmul.mubr.f32.gmra.mrb[0].mxu0 %v116
  %v184 = vpop.f32.mrb[0].mxu0
  %v185 = vadd.f32 %v111, %v184
  %v186 = vpop.f32.mrb[0].mxu0
  %187 = vdwg.mxu0
  %v188 = vld [vmem:[%s4] sm:$0x1]
  %v190 = vlaneseq
  %v191 = vshrl.u32 %v190, 7
  %v192 = vsub.s32 0, %v191
  %v193 = vrot.slane %v188, %v192
  %v195 = vadd.f32 %v185, %v193
  %v196 = vmax.f32 %v195, 0.0
  %v197 = vld [vmem:[%s5] sm:$0xff]
  %v198 = vld [vmem:[%s5 + $0x8] sm:$0xff]
  %v199 = vld [vmem:[%s5 + $0x10] sm:$0xff]
  %v200 = vld [vmem:[%s5 + $0x18] sm:$0xff]
  %v201 = vld [vmem:[%s5 + $0x20] sm:$0xff]
  %v202 = vld [vmem:[%s5 + $0x28] sm:$0xff]
  %v203 = vld [vmem:[%s5 + $0x30] sm:$0xff]
  %v204 = vld [vmem:[%s5 + $0x38] sm:$0xff]
  %v205 = vld [vmem:[%s6] sm:$0x1]
  %v207 = vlaneseq
  %v208 = vshrl.u32 %v207, 7
  %v209 = vsub.s32 0, %v208
  %v210 = vrot.slane %v205, %v209
  %vm212 = vcmask 523264
  %v214 = vsel %vm212, %v196, 0
  %216 = vmatprep.subr.mxu0 0.0
  %217 = vmatpush1.msra.mxu0 %v197
  %218 = vmatprep.subr.mxu0 0.0
  %219 = vmatpush1.msra.mxu0 %v198
  %220 = vmatprep.subr.mxu0 0.0
  %221 = vmatpush1.msra.mxu0 %v199
  %222 = vmatprep.subr.mxu0 0.0
  %223 = vmatpush1.msra.mxu0 %v200
  %224 = vmatprep.subr.mxu0 0.0
  %225 = vmatpush1.msra.mxu0 %v201
  %226 = vmatprep.subr.mxu0 0.0
  %227 = vmatpush1.msra.mxu0 %v202
  %228 = vmatprep.subr.mxu0 0.0
  %229 = vmatpush1.msra.mxu0 %v203
  %230 = vmatprep.subr.mxu0 0.0
  %231 = vmatpush1.msra.mxu0 %v204
  %232 = vmatprep.subr.mxu0 0.0
  %233 = vmatpush1.msra.mxu0 0.0
  %234 = vmatprep.subr.mxu0 0.0
  %235 = vmatpush1.msra.mxu0 0.0
  %236 = vmatprep.subr.mxu0 0.0
  %237 = vmatpush1.msra.mxu0 0.0
  %238 = vmatprep.subr.mxu0 0.0
  %239 = vmatpush1.msra.mxu0 0.0
  %240 = vmatprep.subr.mxu0 0.0
  %241 = vmatpush1.msra.mxu0 0.0
  %242 = vmatprep.subr.mxu0 0.0
  %243 = vmatpush1.msra.mxu0 0.0
  %244 = vmatprep.subr.mxu0 0.0
  %245 = vmatpush1.msra.mxu0 0.0
  %246 = vmatprep.subr.mxu0 0.0
  %247 = vmatpush1.msra.mxu0 0.0
  %248 = vmatprep.subr.mxu0 0.0
  %249 = vmatpush1.msra.mxu0 0.0
  %250 = vmatprep.subr.mxu0 0.0
  %251 = vmatpush1.msra.mxu0 0.0
  %252 = vmatprep.subr.mxu0 0.0
  %253 = vmatpush1.msra.mxu0 0.0
  %254 = vmatprep.subr.mxu0 0.0
  %255 = vmatpush1.msra.mxu0 0.0
  %256 = vmatprep.subr.mxu0 0.0
  %257 = vmatpush1.msra.mxu0 0.0
  %258 = vmatprep.subr.mxu0 0.0
  %259 = vmatpush1.msra.mxu0 0.0
  %260 = vmatprep.subr.mxu0 0.0
  %261 = vmatpush1.msra.mxu0 0.0
  %262 = vmatprep.subr.mxu0 0.0
  %263 = vmatpush1.msra.mxu0 0.0
  %264 = vmatprep.subr.mxu0 0.0
  %265 = vmatpush1.msra.mxu0 0.0
  %266 = vmatprep.subr.mxu0 0.0
  %267 = vmatpush1.msra.mxu0 0.0
  %268 = vmatprep.subr.mxu0 0.0
  %269 = vmatpush1.msra.mxu0 0.0
  %270 = vmatprep.subr.mxu0 0.0
  %271 = vmatpush1.msra.mxu0 0.0
  %272 = vmatprep.subr.mxu0 0.0
  %273 = vmatpush1.msra.mxu0 0.0
  %274 = vmatprep.subr.mxu0 0.0
  %275 = vmatpush1.msra.mxu0 0.0
  %276 = vmatprep.subr.mxu0 0.0
  %277 = vmatpush1.msra.mxu0 0.0
  %278 = vmatprep.subr.mxu0 0.0
  %279 = vmatpush1.msra.mxu0 0.0
  %280 = vmatprep.mubr.f32.mxu0 0.0
  %281 = vmatmul.mubr.f32.gmra.mrb[0].mxu0 %v214
  %v282 = vpop.f32.mrb[0].mxu0
  %v283 = vadd.f32 %v210, %v282
  %v284 = vpop.f32.mrb[0].mxu0
  %285 = vdwg.mxu0
  %v286 = vmax.f32 %v283, 0.0
  %v287 = vld [vmem:[%s7] sm:$0xff]
  %v288 = vld [vmem:[%s7 + $0x8] sm:$0xff]
  %v289 = vld [vmem:[%s7 + $0x10] sm:$0xff]
  %v290 = vld [vmem:[%s7 + $0x18] sm:$0xff]
  %v291 = vld [vmem:[%s7 + $0x20] sm:$0xff]
  %v292 = vld [vmem:[%s7 + $0x28] sm:$0xff]
  %v293 = vld [vmem:[%s7 + $0x30] sm:$0xff]
  %v294 = vld [vmem:[%s7 + $0x38] sm:$0xff]
  %v295 = vld [vmem:[%s8] sm:$0x1]
  %v297 = vlaneseq
  %v298 = vshrl.u32 %v297, 7
  %v299 = vsub.s32 0, %v298
  %v300 = vrot.slane %v295, %v299
  %v303 = vsel %vm212, %v286, 0
  %305 = vmatprep.subr.mxu0 0.0
  %306 = vmatpush1.msra.mxu0 %v287
  %307 = vmatprep.subr.mxu0 0.0
  %308 = vmatpush1.msra.mxu0 %v288
  %309 = vmatprep.subr.mxu0 0.0
  %310 = vmatpush1.msra.mxu0 %v289
  %311 = vmatprep.subr.mxu0 0.0
  %312 = vmatpush1.msra.mxu0 %v290
  %313 = vmatprep.subr.mxu0 0.0
  %314 = vmatpush1.msra.mxu0 %v291
  %315 = vmatprep.subr.mxu0 0.0
  %316 = vmatpush1.msra.mxu0 %v292
  %317 = vmatprep.subr.mxu0 0.0
  %318 = vmatpush1.msra.mxu0 %v293
  %319 = vmatprep.subr.mxu0 0.0
  %320 = vmatpush1.msra.mxu0 %v294
  %321 = vmatprep.subr.mxu0 0.0
  %322 = vmatpush1.msra.mxu0 0.0
  %323 = vmatprep.subr.mxu0 0.0
  %324 = vmatpush1.msra.mxu0 0.0
  %325 = vmatprep.subr.mxu0 0.0
  %326 = vmatpush1.msra.mxu0 0.0
  %327 = vmatprep.subr.mxu0 0.0
  %328 = vmatpush1.msra.mxu0 0.0
  %329 = vmatprep.subr.mxu0 0.0
  %330 = vmatpush1.msra.mxu0 0.0
  %331 = vmatprep.subr.mxu0 0.0
  %332 = vmatpush1.msra.mxu0 0.0
  %333 = vmatprep.subr.mxu0 0.0
  %334 = vmatpush1.msra.mxu0 0.0
  %335 = vmatprep.subr.mxu0 0.0
  %336 = vmatpush1.msra.mxu0 0.0
  %337 = vmatprep.subr.mxu0 0.0
  %338 = vmatpush1.msra.mxu0 0.0
  %339 = vmatprep.subr.mxu0 0.0
  %340 = vmatpush1.msra.mxu0 0.0
  %341 = vmatprep.subr.mxu0 0.0
  %342 = vmatpush1.msra.mxu0 0.0
  %343 = vmatprep.subr.mxu0 0.0
  %344 = vmatpush1.msra.mxu0 0.0
  %345 = vmatprep.subr.mxu0 0.0
  %346 = vmatpush1.msra.mxu0 0.0
  %347 = vmatprep.subr.mxu0 0.0
  %348 = vmatpush1.msra.mxu0 0.0
  %349 = vmatprep.subr.mxu0 0.0
  %350 = vmatpush1.msra.mxu0 0.0
  %351 = vmatprep.subr.mxu0 0.0
  %352 = vmatpush1.msra.mxu0 0.0
  %353 = vmatprep.subr.mxu0 0.0
  %354 = vmatpush1.msra.mxu0 0.0
  %355 = vmatprep.subr.mxu0 0.0
  %356 = vmatpush1.msra.mxu0 0.0
  %357 = vmatprep.subr.mxu0 0.0
  %358 = vmatpush1.msra.mxu0 0.0
  %359 = vmatprep.subr.mxu0 0.0
  %360 = vmatpush1.msra.mxu0 0.0
  %361 = vmatprep.subr.mxu0 0.0
  %362 = vmatpush1.msra.mxu0 0.0
  %363 = vmatprep.subr.mxu0 0.0
  %364 = vmatpush1.msra.mxu0 0.0
  %365 = vmatprep.subr.mxu0 0.0
  %366 = vmatpush1.msra.mxu0 0.0
  %367 = vmatprep.subr.mxu0 0.0
  %368 = vmatpush1.msra.mxu0 0.0
  %369 = vmatprep.mubr.f32.mxu0 0.0
  %370 = vmatmul.mubr.f32.gmra.mrb[0].mxu0 %v303
  %v371 = vpop.f32.mrb[0].mxu0
  %v372 = vadd.f32 %v300, %v371
  %v373 = vpop.f32.mrb[0].mxu0
  %374 = vdwg.mxu0
  %375 = vst.msk [vmem:[%s9] sm:$0xff] %vm36, %v372
  // Predicated region
  $region38: #{critic_forward.1} parent=0 // pred_check
    _
  $region39: #{critic_forward.1} parent=0 // pred_check_branch
    %377 = sbr.rel (0) target = $region41
  $region40: #{critic_forward.1} parent=0 // pred_region
    _
  $region41: #{critic_forward.1} parent=0 // pred_fallthru
    _
  // Predicated region
  $region42: #{critic_forward.1} parent=0 // pred_check
    _
  $region43: #{critic_forward.1} parent=0 // pred_check_branch
    %379 = sbr.rel (0) target = $region45
  $region44: #{critic_forward.1} parent=0 // pred_region
    _
  $region45: #{critic_forward.1} parent=0 // pred_fallthru
    _

</llo_original>
